<compile_context>
chip_gen: v5e
topology: v5e:2x2
jax: 0.10.0
libtpu: 0.0.40
codegen_flags: <defaults>
</compile_context>

<pallas_src>
import functools

import numpy as np
import jax
import jax.numpy as jnp
from jax import lax
from jax.experimental import pallas as pl
from jax.experimental.pallas import tpu as pltpu


def _round_up(x, m):
    return (x + m - 1) // m * m


def _interp_matrix(n_in, n_out):
    """1-D linear-resize matrix matching F.interpolate(mode='bilinear',
    align_corners=True): y = M @ x.  (n_out == 1 is a degenerate 1-pixel
    output branch; irrelevant for x2 upsampling, kept for completeness.)"""
    if n_out == 1:
        M = np.zeros((1, n_in), np.float32)
        M[0, 0] = 1.0
        return M
    i = np.arange(n_out)
    src = i * (n_in - 1) / (n_out - 1)
    lo = np.clip(np.floor(src).astype(np.int64), 0, n_in - 1)
    hi = np.minimum(lo + 1, n_in - 1)
    w_hi = (src - lo).astype(np.float32)
    w_lo = (1.0 - w_hi).astype(np.float32)
    M = np.zeros((n_out, n_in), np.float32)
    M[i, lo] += w_lo
    M[i, hi] += w_hi
    return M


def _shifted_interp(A, K, pad, n_conv_out):
    """B[k, i, :] = A[i + k - pad, :] (zero row when the conv tap lands inside
    the zero padding).  Folds resize + spatial zero-pad + tap shift per tap."""
    n_up, n_in = A.shape
    B = np.zeros((K, n_conv_out, n_in), np.float32)
    for k in range(K):
        for i in range(n_conv_out):
            s = i + k - pad
            if 0 <= s < n_up:
                B[k, i, :] = A[s, :]
    return B


def _deconv_kernel(x_ref, gh_ref, bwt_ref, bias_ref, o_ref,
                   *, Nb, K, Cin, H, W, Cout, Hc, Wcp, operand_dtype):
    # x_ref:    (Nb, Cin, H, W)        Nb batches, NCHW
    # gh_ref:   (K, Cout*Hc, Cin*H)    height-side operator (conv weights folded)
    # bwt_ref:  (W, K*Wcp)             width-side operator, taps stacked on lanes
    # bias_ref: (Cout*Hc, 1)           bias per output row, lane-broadcast here
    # o_ref:    (Nb, Cout, Hc, Wcp)    lane-dense (Wcp = Wc rounded up to 128)
    cin_h = Cin * H
    x2d = x_ref[...].reshape(Nb * cin_h, W).astype(operand_dtype)

    # Stage 1 (width side): one lane-dense MXU matmul, contraction over w.
    v = jnp.dot(x2d, bwt_ref[...],
                preferred_element_type=jnp.float32)          # (Nb*Cin*H, K*Wcp)
    v = v.astype(operand_dtype)

    bias_init = jnp.broadcast_to(bias_ref[...], (Cout * Hc, Wcp))

    # Stage 2 (height side): per batch, K accumulated MXU matmuls (128-lane
    # output, Cin*H-deep contraction); bias folded into the accumulator init.
    # TODO(synk): on v7x, express the kw-sum as one chained contraction
    # (einsum 'kri,kij->rj') so the MRB accumulates in place and the K-1 VPU
    # adds disappear.
    for n in range(Nb):                                       # static unroll
        vn = v[n * cin_h:(n + 1) * cin_h, :]                  # aligned sublane slice
        acc = bias_init
        for kw in range(K):                                   # static unroll
            acc = acc + jnp.dot(gh_ref[kw],
                                vn[:, kw * Wcp:(kw + 1) * Wcp],
                                preferred_element_type=jnp.float32)
        o_ref[n] = acc.reshape(Cout, Hc, Wcp).astype(o_ref.dtype)


def _pick_batch_tile(N, cin_h, target_rows=256):
    """Batches per grid step: fill stage-1 rows / amortize per-step overhead,
    but keep >=2 grid steps whenever N>=2 so v7x's two TensorCores both work."""
    best = 1
    for nb in range(1, N + 1):
        if N % nb or nb * cin_h > target_rows:
            continue
        if N // nb >= 2 or N == 1:
            best = nb
    return best


def deconv_forward(x, weight, bias, *, padding, operand_dtype=jnp.bfloat16):
    """x: (N, Cin, H, W) f32 NCHW. weight: (Cout, Cin, K, K). bias: (Cout,)."""
    N, Cin, H, W = x.shape
    Cout, _, K, _ = weight.shape
    Hout, Wout = 2 * H, 2 * W
    Hc = Hout + 2 * padding - K + 1
    Wc = Wout + 2 * padding - K + 1
    Wcp = _round_up(Wc, 128)                  # lane-dense output columns
    cin_h, rows = Cin * H, Cout * Hc

    # Static (shape-only) 1-D operators, built once in numpy.
    Bh = _shifted_interp(_interp_matrix(H, Hout), K, padding, Hc)    # (K, Hc, H)
    Bw = _shifted_interp(_interp_matrix(W, Wout), K, padding, Wc)    # (K, Wc, W)
    Bw_pad = np.zeros((K, Wcp, W), np.float32)
    Bw_pad[:, :Wc, :] = Bw                    # padded columns stay exactly zero
    # bwt[w, kw*Wcp + j] = Bw_pad[kw, j, w]  -- taps stacked along the lane axis.
    bwt = jnp.asarray(np.ascontiguousarray(
        Bw_pad.transpose(2, 0, 1).reshape(W, K * Wcp))).astype(operand_dtype)

    # Fold conv weight's kh taps + channel sum + height resize into one operator:
    #   gh[kw, (o, i), (c, h)] = sum_kh weight[o, c, kh, kw] * Bh[kh, i, h]
    gh = jnp.einsum('ocxy,xih->yoich', weight, jnp.asarray(Bh))
    gh = gh.reshape(K, rows, cin_h).astype(operand_dtype)

    # Thin bias column; lane-broadcast happens inside the kernel.
    bias_col = jnp.repeat(bias.astype(jnp.float32), Hc)[:, None]     # (Cout*Hc, 1)

    Nb = _pick_batch_tile(N, cin_h)
    grid = (N // Nb,)

    kernel = functools.partial(_deconv_kernel, Nb=Nb, K=K, Cin=Cin, H=H, W=W,
                               Cout=Cout, Hc=Hc, Wcp=Wcp,
                               operand_dtype=operand_dtype)

    # Rough VMEM budget (double-buffered blocks + live intermediates) + headroom.
    # TODO(synk): for large Hc, tile Hc into row blocks (K-1 halo folded into Bh)
    # and single-buffer the grid-invariant gh (pl.Buffered(1) / manual staging)
    # so the footprint stays under v7x's 64 MiB VMEM.
    esz = np.dtype(operand_dtype).itemsize
    blk_bytes = (Nb * Cin * H * W * 4 + Nb * Cout * Hc * Wcp * 4          # x, out
                 + K * rows * cin_h * esz + W * K * Wcp * esz + rows * 4  # gh, bwt, bias
                 + Nb * cin_h * K * Wcp * (4 + esz) + rows * Wcp * 4)     # v, acc
    vmem_limit = int(min(64 * 2**20, max(16 * 2**20, 2 * blk_bytes + 4 * 2**20)))

    out_padded = pl.pallas_call(
        kernel,
        out_shape=jax.ShapeDtypeStruct((N, Cout, Hc, Wcp), jnp.float32),
        grid=grid,
        in_specs=[
            pl.BlockSpec((Nb, Cin, H, W), lambda n: (n, 0, 0, 0)),
            pl.BlockSpec((K, rows, cin_h), lambda n: (0, 0, 0)),
            pl.BlockSpec((W, K * Wcp), lambda n: (0, 0)),
            pl.BlockSpec((rows, 1), lambda n: (0, 0)),
        ],
        out_specs=pl.BlockSpec((Nb, Cout, Hc, Wcp), lambda n: (n, 0, 0, 0)),
        compiler_params=pltpu.CompilerParams(
            dimension_semantics=("parallel",),   # v7x: grid steps split across 2 TCs
            vmem_limit_bytes=vmem_limit),
    )(x, gh, bwt, bias_col)

    return out_padded[..., :Wc]                  # drop the lane padding


def deconv_reference(x, weight, bias, *, padding):
    """Pure-JAX reference (independent path) for correctness checking."""
    N, Cin, H, W = x.shape
    Hout, Wout = 2 * H, 2 * W
    Ah = jnp.asarray(_interp_matrix(H, Hout))
    Aw = jnp.asarray(_interp_matrix(W, Wout))
    up = jnp.einsum('oh,nchw,pw->ncop', Ah, x, Aw)
    out = lax.conv_general_dilated(
        up, weight, window_strides=(1, 1),
        padding=[(padding, padding), (padding, padding)],
        dimension_numbers=('NCHW', 'OIHW', 'NCHW'))
    return out + bias[None, :, None, None]


if __name__ == "__main__":
    key = jax.random.PRNGKey(0)
    kx, kwt, kb = jax.random.split(key, 3)

    # deconv(input_channel=4, output_channel=8, kernel_size=3, padding=1)
    N, Cin, Cout, H, W, K, P = 2, 4, 8, 16, 16, 3, 1
    x = jax.random.normal(kx, (N, Cin, H, W), jnp.float32)

    fan_in = Cin * K * K
    bound = 1.0 / np.sqrt(fan_in)            # PyTorch Conv2d default init range
    weight = jax.random.uniform(kwt, (Cout, Cin, K, K), jnp.float32, -bound, bound)
    bias = jax.random.uniform(kb, (Cout,), jnp.float32, -bound, bound)

    ref = deconv_reference(x, weight, bias, padding=P)
    expected_shape = (N, Cout, 2 * H + 2 * P - K + 1, 2 * W + 2 * P - K + 1)

    # Structure check with f32 MXU operands (tight tolerance).
    out_f32 = jax.block_until_ready(
        deconv_forward(x, weight, bias, padding=P, operand_dtype=jnp.float32))
    assert out_f32.shape == expected_shape
    np.testing.assert_allclose(np.asarray(out_f32), np.asarray(ref),
                               atol=1e-4, rtol=1e-4)

    # Default fast path: bf16 MXU operands, f32 accumulation (loose tolerance).
    out_bf16 = jax.block_until_ready(deconv_forward(x, weight, bias, padding=P))
    assert out_bf16.shape == expected_shape
    np.testing.assert_allclose(np.asarray(out_bf16), np.asarray(ref),
                               atol=5e-2, rtol=5e-2)

    # Exercise the multi-batch-per-grid-step path (Nb > 1).
    x4 = jax.random.normal(kx, (4, Cin, H, W), jnp.float32)
    out4 = jax.block_until_ready(
        deconv_forward(x4, weight, bias, padding=P, operand_dtype=jnp.float32))
    np.testing.assert_allclose(
        np.asarray(out4),
        np.asarray(deconv_reference(x4, weight, bias, padding=P)),
        atol=1e-4, rtol=1e-4)

    print("KERNEL_OK")
</pallas_src>

<mosaic_0001>
module attributes {stable_mosaic.version = 11 : i64} {
  func.func @_deconv_kernel(%arg0: i32, %arg1: memref<1x4x16x16xf32, #tpu.memory_space<vmem>>, %arg2: memref<3x256x64xf32, #tpu.memory_space<vmem>>, %arg3: memref<16x384xf32, #tpu.memory_space<vmem>>, %arg4: memref<256x1xf32, #tpu.memory_space<vmem>>, %arg5: memref<1x8x32x128xf32, #tpu.memory_space<vmem>>) attributes {dimension_semantics = [#tpu.dimension_semantics<parallel>], iteration_bounds = array<i64: 2>, scalar_prefetch = 0 : i64, scratch_operands = 0 : i64, tpu.core_type = #tpu.core_type<tc>, window_params = [{transform_indices = @transform_0, window_bounds = array<i64: 1, 4, 16, 16>}, {pipeline_mode = #tpu.pipeline_mode<synchronous>, transform_indices = @transform_1, window_bounds = array<i64: 3, 256, 64>}, {pipeline_mode = #tpu.pipeline_mode<synchronous>, transform_indices = @transform_2, window_bounds = array<i64: 16, 384>}, {pipeline_mode = #tpu.pipeline_mode<synchronous>, transform_indices = @transform_3, window_bounds = array<i64: 256, 1>}, {transform_indices = @transform_4, window_bounds = array<i64: 1, 8, 32, 128>}]} {
    %c0 = arith.constant 0 : index
    %c0_0 = arith.constant 0 : index
    %c0_1 = arith.constant 0 : index
    %c0_2 = arith.constant 0 : index
    %0 = vector.load %arg1[%c0, %c0_0, %c0_1, %c0_2] : memref<1x4x16x16xf32, #tpu.memory_space<vmem>>, vector<1x4x16x16xf32>
    %1 = vector.shape_cast %0 : vector<1x4x16x16xf32> to vector<64x16xf32>
    %c0_3 = arith.constant 0 : index
    %c0_4 = arith.constant 0 : index
    %2 = vector.load %arg3[%c0_3, %c0_4] : memref<16x384xf32, #tpu.memory_space<vmem>>, vector<16x384xf32>
    %cst = arith.constant dense<0.000000e+00> : vector<64x384xf32>
    %3 = tpu.matmul %1, %2, %cst {dimension_numbers = #tpu.dot_dimension_numbers<[1], [0], [0], [1], [0, 0, 1, 1], [], []>} : vector<64x16xf32>, vector<16x384xf32>, vector<64x384xf32> -> vector<64x384xf32>
    %c0_5 = arith.constant 0 : index
    %c0_6 = arith.constant 0 : index
    %4 = vector.load %arg4[%c0_5, %c0_6] : memref<256x1xf32, #tpu.memory_space<vmem>>, vector<256x1xf32>
    %5 = vector.shape_cast %4 : vector<256x1xf32> to vector<256x1xf32>
    %6 = vector.broadcast %5 : vector<256x1xf32> to vector<256x128xf32>
    %c0_7 = arith.constant 0 : index
    %c0_8 = arith.constant 0 : index
    %c0_9 = arith.constant 0 : index
    %7 = vector.load %arg2[%c0_7, %c0_8, %c0_9] : memref<3x256x64xf32, #tpu.memory_space<vmem>>, vector<1x256x64xf32>
    %8 = vector.shape_cast %7 : vector<1x256x64xf32> to vector<256x64xf32>
    %9 = vector.extract_strided_slice %3 {offsets = [0, 0], sizes = [64, 128], strides = [1, 1]} : vector<64x384xf32> to vector<64x128xf32>
    %cst_10 = arith.constant dense<0.000000e+00> : vector<256x128xf32>
    %10 = tpu.matmul %8, %9, %cst_10 {dimension_numbers = #tpu.dot_dimension_numbers<[1], [0], [0], [1], [0, 0, 1, 1], [], []>} : vector<256x64xf32>, vector<64x128xf32>, vector<256x128xf32> -> vector<256x128xf32>
    %11 = arith.addf %6, %10 : vector<256x128xf32>
    %c1 = arith.constant 1 : index
    %c0_11 = arith.constant 0 : index
    %c0_12 = arith.constant 0 : index
    %12 = vector.load %arg2[%c1, %c0_11, %c0_12] : memref<3x256x64xf32, #tpu.memory_space<vmem>>, vector<1x256x64xf32>
    %13 = vector.shape_cast %12 : vector<1x256x64xf32> to vector<256x64xf32>
    %14 = vector.extract_strided_slice %3 {offsets = [0, 128], sizes = [64, 128], strides = [1, 1]} : vector<64x384xf32> to vector<64x128xf32>
    %cst_13 = arith.constant dense<0.000000e+00> : vector<256x128xf32>
    %15 = tpu.matmul %13, %14, %cst_13 {dimension_numbers = #tpu.dot_dimension_numbers<[1], [0], [0], [1], [0, 0, 1, 1], [], []>} : vector<256x64xf32>, vector<64x128xf32>, vector<256x128xf32> -> vector<256x128xf32>
    %16 = arith.addf %11, %15 : vector<256x128xf32>
    %c2 = arith.constant 2 : index
    %c0_14 = arith.constant 0 : index
    %c0_15 = arith.constant 0 : index
    %17 = vector.load %arg2[%c2, %c0_14, %c0_15] : memref<3x256x64xf32, #tpu.memory_space<vmem>>, vector<1x256x64xf32>
    %18 = vector.shape_cast %17 : vector<1x256x64xf32> to vector<256x64xf32>
    %19 = vector.extract_strided_slice %3 {offsets = [0, 256], sizes = [64, 128], strides = [1, 1]} : vector<64x384xf32> to vector<64x128xf32>
    %cst_16 = arith.constant dense<0.000000e+00> : vector<256x128xf32>
    %20 = tpu.matmul %18, %19, %cst_16 {dimension_numbers = #tpu.dot_dimension_numbers<[1], [0], [0], [1], [0, 0, 1, 1], [], []>} : vector<256x64xf32>, vector<64x128xf32>, vector<256x128xf32> -> vector<256x128xf32>
    %21 = arith.addf %16, %20 : vector<256x128xf32>
    %22 = vector.shape_cast %21 : vector<256x128xf32> to vector<8x32x128xf32>
    %c0_17 = arith.constant 0 : index
    %c0_18 = arith.constant 0 : index
    %c0_19 = arith.constant 0 : index
    %c0_20 = arith.constant 0 : index
    %23 = vector.load %arg5[%c0_17, %c0_18, %c0_19, %c0_20] : memref<1x8x32x128xf32, #tpu.memory_space<vmem>>, vector<1x8x32x128xf32>
    %24 = vector.shape_cast %23 : vector<1x8x32x128xf32> to vector<8x32x128xf32>
    %25 = vector.shape_cast %22 : vector<8x32x128xf32> to vector<1x8x32x128xf32>
    tpu.vector_store %arg5[%c0_17, %c0_18, %c0_19, %c0_20], %25 {strides = array<i32>} : memref<1x8x32x128xf32, #tpu.memory_space<vmem>>, vector<1x8x32x128xf32>,
    return
  }
  func.func @transform_0(%arg0: i32) -> (i32, i32, i32, i32) {
    %c0_i32 = arith.constant 0 : i32
    %c0_i32_0 = arith.constant 0 : i32
    %c0_i32_1 = arith.constant 0 : i32
    %c0_i32_2 = arith.constant 0 : i32
    return %arg0, %c0_i32, %c0_i32_0, %c0_i32_1 : i32, i32, i32, i32
  }
  func.func @transform_1(%arg0: i32) -> (i32, i32, i32) {
    %c0_i32 = arith.constant 0 : i32
    %c0_i32_0 = arith.constant 0 : i32
    %c0_i32_1 = arith.constant 0 : i32
    %c0_i32_2 = arith.constant 0 : i32
    return %c0_i32, %c0_i32_0, %c0_i32_1 : i32, i32, i32
  }
  func.func @transform_2(%arg0: i32) -> (i32, i32) {
    %c0_i32 = arith.constant 0 : i32
    %c0_i32_0 = arith.constant 0 : i32
    %c0_i32_1 = arith.constant 0 : i32
    return %c0_i32, %c0_i32_0 : i32, i32
  }
  func.func @transform_3(%arg0: i32) -> (i32, i32) {
    %c0_i32 = arith.constant 0 : i32
    %c0_i32_0 = arith.constant 0 : i32
    %c0_i32_1 = arith.constant 0 : i32
    return %c0_i32, %c0_i32_0 : i32, i32
  }
  func.func @transform_4(%arg0: i32) -> (i32, i32, i32, i32) {
    %c0_i32 = arith.constant 0 : i32
    %c0_i32_0 = arith.constant 0 : i32
    %c0_i32_1 = arith.constant 0 : i32
    %c0_i32_2 = arith.constant 0 : i32
    return %arg0, %c0_i32, %c0_i32_0, %c0_i32_1 : i32, i32, i32, i32
  }
}

</mosaic_0001>

<llo_original>
// kernel: tpu_custom_call.1
$region0: #{tpu_custom_call.1}
  #allocation0 [shape = 'u32[]', space=smem, size = 0x4, offset = 0x4, fixed_abs, tag = 'smem constant byte address 0x4 - core index']
  #allocation1 [shape = 'u32[72,128]{1,0:T(1,128)}', space=vmem, size = 0x9000, scoped, tag = 'internal scratch']
  %s0 = inlined_call_operand.vmem [shape: f32[2,4,16,16], index: 0, kind: input, shape index: {}]
  %s1 = inlined_call_operand.vmem [shape: f32[3,256,64], index: 1, kind: input, shape index: {}]
  %s2 = inlined_call_operand.vmem [shape: f32[16,384], index: 2, kind: input, shape index: {}]
  %s3 = inlined_call_operand.vmem [shape: f32[256,1], index: 3, kind: input, shape index: {}]
  %s4 = inlined_call_operand.hbm [shape: f32[2,8,32,128], index: 4, kind: output, shape index: {}]
  %s5 = sld [smem:[#allocation0]]
  $region49: #{tpu_custom_call.1} parent=0
    _
  %s7 = ssub.s32 1, %s5
  %s8 = scalar_select 0, %s7, %s5
  $region1: #{tpu_custom_call.1} parent=0
    #allocation2 [shape = 'u8[262144]{0}', space=vmem, size = 0x40000, scoped, tag = 'output window, operand 0']
    #allocation3 [shape = 's32[2]{0}', space=sflag, size = 0x8, scoped, tag = 'scoped memory for tpu_custom_call.1']
    %9 = vsyncpa [#allocation3], 0
    %s10 = scalar_lea.sflag [#allocation3], 1
    %11 = vsyncpa %s10, 0
    loop: start=0, step=1, limit=4
    $region2: #{tpu_custom_call.1} parent=1 // loop_pre_header
      _
    $region3: #{tpu_custom_call.1} parent=1 // loop_header
      %s13 = sphi 0, %s17
      %p14 = scmp.ge.s32.totalorder %s13, 4
      %s23 = sphi 0, %s25
      %s26 = sphi 0, %s23
      %s27 = sphi 0, %s26
      %s43 = sphi 0, %s27
      %s47 = sphi 0, %s47
      %s49 = sphi 0, %s47
      %s50 = sphi 0, %s49
      %s64 = sphi 0, %s50
      %s68 = sphi 0, %s68
      %s70 = sphi 0, %s68
      %s71 = sphi 0, %s70
      %s85 = sphi 0, %s71
      %s89 = sphi 0, %s89
      %s91 = sphi 0, %s89
      %s92 = sphi 0, %s91
      %s106 = sphi 0, %s92
      %s112 = sphi 0, %s114
      %s115 = sphi 0, %s112
      %s116 = sphi 0, %s115
      %s132 = sphi 0, %s116
    $region4: #{tpu_custom_call.1} parent=1 // loop_header_branch
      %16 = sbr.rel (%p14) target = $region8
    $region5: #{tpu_custom_call.1} parent=1 // loop_body
      %s18 = ssub.s32 %s13, 1
      %s19 = ssub.s32 %s13, 2
      %s20 = sadd.s32 %s13, 1
      %s21 = ssub.s32 %s13, %s20
      %p22 = scmp.eq.s32.totalorder %s21, 0
      %s24 = sadd.s32 %s23, 1
      %s25 = scalar_select %p22, %s23, %s24
      %p28 = pneg %p22
      %p29 = scmp.eq.s32.totalorder %s13, 1
      %p30 = por %p28, %p29
      %p31 = scmp.ne.s32.totalorder %s23, %s26
      %p32 = scmp.eq.s32.totalorder %s13, 0
      %p33 = por %p31, %p32
      %p34 = scmp.ne.s32.totalorder %s23, %s26
      %p35 = scmp.eq.s32.totalorder %s18, 1
      %p36 = por %p34, %p35
      %p37 = scmp.ne.s32.totalorder %s26, %s27
      %p38 = scmp.eq.s32.totalorder %s18, 0
      %p39 = por %p37, %p38
      %p40 = scmp.ne.s32.totalorder %s26, %s27
      %p41 = scmp.eq.s32.totalorder %s19, 1
      %p42 = por %p40, %p41
      %p44 = scmp.ne.s32.totalorder %s27, %s43
      %p45 = scmp.eq.s32.totalorder %s19, 0
      %p46 = por %p44, %p45
      %s48 = sadd.s32 %s47, 1
      %p51 = scmp.eq.s32.totalorder %s13, 1
      %p52 = scmp.ne.s32.totalorder %s47, %s49
      %p53 = scmp.eq.s32.totalorder %s13, 0
      %p54 = por %p52, %p53
      %p55 = scmp.ne.s32.totalorder %s47, %s49
      %p56 = scmp.eq.s32.totalorder %s18, 1
      %p57 = por %p55, %p56
      %p58 = scmp.ne.s32.totalorder %s49, %s50
      %p59 = scmp.eq.s32.totalorder %s18, 0
      %p60 = por %p58, %p59
      %p61 = scmp.ne.s32.totalorder %s49, %s50
      %p62 = scmp.eq.s32.totalorder %s19, 1
      %p63 = por %p61, %p62
      %p65 = scmp.ne.s32.totalorder %s50, %s64
      %p66 = scmp.eq.s32.totalorder %s19, 0
      %p67 = por %p65, %p66
      %s69 = sadd.s32 %s68, 1
      %p72 = scmp.eq.s32.totalorder %s13, 1
      %p73 = scmp.ne.s32.totalorder %s68, %s70
      %p74 = scmp.eq.s32.totalorder %s13, 0
      %p75 = por %p73, %p74
      %p76 = scmp.ne.s32.totalorder %s68, %s70
      %p77 = scmp.eq.s32.totalorder %s18, 1
      %p78 = por %p76, %p77
      %p79 = scmp.ne.s32.totalorder %s70, %s71
      %p80 = scmp.eq.s32.totalorder %s18, 0
      %p81 = por %p79, %p80
      %p82 = scmp.ne.s32.totalorder %s70, %s71
      %p83 = scmp.eq.s32.totalorder %s19, 1
      %p84 = por %p82, %p83
      %p86 = scmp.ne.s32.totalorder %s71, %s85
      %p87 = scmp.eq.s32.totalorder %s19, 0
      %p88 = por %p86, %p87
      %s90 = sadd.s32 %s89, 1
      %p93 = scmp.eq.s32.totalorder %s13, 1
      %p94 = scmp.ne.s32.totalorder %s89, %s91
      %p95 = scmp.eq.s32.totalorder %s13, 0
      %p96 = por %p94, %p95
      %p97 = scmp.ne.s32.totalorder %s89, %s91
      %p98 = scmp.eq.s32.totalorder %s18, 1
      %p99 = por %p97, %p98
      %p100 = scmp.ne.s32.totalorder %s91, %s92
      %p101 = scmp.eq.s32.totalorder %s18, 0
      %p102 = por %p100, %p101
      %p103 = scmp.ne.s32.totalorder %s91, %s92
      %p104 = scmp.eq.s32.totalorder %s19, 1
      %p105 = por %p103, %p104
      %p107 = scmp.ne.s32.totalorder %s92, %s106
      %p108 = scmp.eq.s32.totalorder %s19, 0
      %p109 = por %p107, %p108
      %s110 = ssub.s32 %s13, %s20
      %p111 = scmp.eq.s32.totalorder %s110, 0
      %s113 = sadd.s32 %s112, 1
      %s114 = scalar_select %p111, %s112, %s113
      %p117 = pneg %p111
      %p118 = scmp.eq.s32.totalorder %s13, 1
      %p119 = por %p117, %p118
      %p120 = scmp.ne.s32.totalorder %s112, %s115
      %p121 = scmp.eq.s32.totalorder %s13, 0
      %p122 = por %p120, %p121
      %p123 = scmp.ne.s32.totalorder %s112, %s115
      %p124 = scmp.eq.s32.totalorder %s18, 1
      %p125 = por %p123, %p124
      %p126 = scmp.ne.s32.totalorder %s115, %s116
      %p127 = scmp.eq.s32.totalorder %s18, 0
      %p128 = por %p126, %p127
      %p129 = scmp.ne.s32.totalorder %s115, %s116
      %p130 = scmp.eq.s32.totalorder %s19, 1
      %p131 = por %p129, %p130
      %p133 = scmp.ne.s32.totalorder %s116, %s132
      %p134 = scmp.eq.s32.totalorder %s19, 0
      %p135 = por %p133, %p134
      %p136 = scmp.le.s32.totalorder 1, %s13
      %p137 = scmp.lt.s32.totalorder %s13, 3
      %p138 = pnand %p136, %p137
      %p139 = pneg %p138
      // Predicated region
      $region9: #{tpu_custom_call.1} parent=5 // pred_check
        _
      $region10: #{tpu_custom_call.1} parent=5 // pred_check_branch
        %141 = sbr.rel (%p138) target = $region12
      $region11: #{tpu_custom_call.1} parent=5 // pred_region
        %s142 = ssub.s32 %s13, 1
        // Predicated region
        $region13: #{tpu_custom_call.1} parent=11 // pred_check
          %p143 = pneg %p60
        $region14: #{tpu_custom_call.1} parent=11 // pred_check_branch
          %145 = sbr.rel (%p143) target = $region16
        $region15: #{tpu_custom_call.1} parent=11 // pred_region
          _
        $region16: #{tpu_custom_call.1} parent=11 // pred_fallthru
          _
        // Predicated region
        $region17: #{tpu_custom_call.1} parent=11 // pred_check
          %p146 = pneg %p81
        $region18: #{tpu_custom_call.1} parent=11 // pred_check_branch
          %148 = sbr.rel (%p146) target = $region20
        $region19: #{tpu_custom_call.1} parent=11 // pred_region
          _
        $region20: #{tpu_custom_call.1} parent=11 // pred_fallthru
          _
        // Predicated region
        $region21: #{tpu_custom_call.1} parent=11 // pred_check
          %p149 = pneg %p102
        $region22: #{tpu_custom_call.1} parent=11 // pred_check_branch
          %151 = sbr.rel (%p149) target = $region24
        $region23: #{tpu_custom_call.1} parent=11 // pred_region
          _
        $region24: #{tpu_custom_call.1} parent=11 // pred_fallthru
          _
      $region12: #{tpu_custom_call.1} parent=5 // pred_fallthru
        _
      %p152 = scmp.lt.s32.totalorder %s13, 2
      // Predicated region
      $region25: #{tpu_custom_call.1} parent=5 // pred_check
        %p153 = pneg %p152
      $region26: #{tpu_custom_call.1} parent=5 // pred_check_branch
        %155 = sbr.rel (%p153) target = $region28
      $region27: #{tpu_custom_call.1} parent=5 // pred_region
        // Predicated region
        $region29: #{tpu_custom_call.1} parent=27 // pred_check
          %p156 = pneg %p33
        $region30: #{tpu_custom_call.1} parent=27 // pred_check_branch
          %158 = sbr.rel (%p156) target = $region32
        $region31: #{tpu_custom_call.1} parent=27 // pred_region
          %p159 = scmp.lt.s32.totalorder %s13, 1
          %s160 = scalar_select %p159, %s13, 1
          %s161 = smul.addr %s160, 8
          %s162 = smul.addr %s161, 8
          %s163 = scalar_lea.vmem %s0, %s162
        $region32: #{tpu_custom_call.1} parent=27 // pred_fallthru
          _
      $region28: #{tpu_custom_call.1} parent=5 // pred_fallthru
        _
      %p164 = scmp.le.s32.totalorder 1, %s13
      %p165 = scmp.lt.s32.totalorder %s13, 3
      %p166 = pnand %p164, %p165
      %p167 = pneg %p166
      // Predicated region
      $region33: #{tpu_custom_call.1} parent=5 // pred_check
        _
      $region34: #{tpu_custom_call.1} parent=5 // pred_check_branch
        %169 = sbr.rel (%p166) target = $region36
      $region35: #{tpu_custom_call.1} parent=5 // pred_region
        %s170 = ssub.s32 %s13, 1
        %p171 = scmp.lt.s32.totalorder %s18, 1
        %s172 = scalar_select %p171, %s18, 1
        %s173 = smul.addr %s172, 8
        %s174 = smul.addr %s173, 8
        %s175 = scalar_lea.vmem %s0, %s174
        %p176 = pneg %p39
        %p177 = pneg %p36
        %p178 = pneg %p60
        %p179 = pneg %p57
        %p180 = pneg %p81
        %p181 = pneg %p78
        %p182 = pneg %p102
        %p183 = pneg %p99
        %p184 = pneg %p128
        %p185 = pneg %p125
        %s186 = sand.u32 %s115, 1
        %s187 = scalar_lea.sflag [#allocation3], %s186
        %s188 = sand.u32 %s115, 1
        %s189 = smul.addr %s188, 256
        %s190 = scalar_lea.vmem [#allocation2], %s189
        %p191 = scmp.lt.s32.totalorder %s18, 1
        %s192 = scalar_select %p191, %s18, 1
        %s193 = smul.addr %s192, 8
        %s194 = smul.addr %s193, 8
        %s195 = scalar_lea.vmem %s0, %s194
        %v196 = vld [vmem:[%s195] sm:$0xff]
        %v197 = vld [vmem:[%s195 + $0x8] sm:$0xff]
        %v198 = vld [vmem:[%s195 + $0x10] sm:$0xff]
        %v199 = vld [vmem:[%s195 + $0x18] sm:$0xff]
        %v200 = vld [vmem:[%s195 + $0x20] sm:$0xff]
        %v201 = vld [vmem:[%s195 + $0x28] sm:$0xff]
        %v202 = vld [vmem:[%s195 + $0x30] sm:$0xff]
        %v203 = vld [vmem:[%s195 + $0x38] sm:$0xff]
        %v204 = vld [vmem:[%s2] sm:$0xff]
        %v205 = vld [vmem:[%s2 + $0x8] sm:$0xff]
        %v206 = vld [vmem:[%s2 + $0x10] sm:$0xff]
        %v207 = vld [vmem:[%s2 + $0x18] sm:$0xff]
        %v208 = vld [vmem:[%s2 + $0x20] sm:$0xff]
        %v209 = vld [vmem:[%s2 + $0x28] sm:$0xff]
        %vm210 = vcmask 130048
        %v212 = vsel %vm210, %v196, 0
        %v215 = vsel %vm210, %v197, 0
        %v218 = vsel %vm210, %v198, 0
        %v221 = vsel %vm210, %v199, 0
        %v224 = vsel %vm210, %v200, 0
        %v227 = vsel %vm210, %v201, 0
        %v230 = vsel %vm210, %v202, 0
        %v233 = vsel %vm210, %v203, 0
        %235 = vmatpush.msra.mxu0 0.0
        %236 = vmatpush.msra.mxu0 0.0
        %237 = vmatpush.msra.mxu0 0.0
        %238 = vmatpush.msra.mxu0 0.0
        %239 = vmatpush.msra.mxu0 0.0
        %240 = vmatpush.msra.mxu0 0.0
        %241 = vmatpush.msra.mxu0 0.0
        %242 = vmatpush.msra.mxu0 0.0
        %243 = vmatpush.msra.mxu0 0.0
        %244 = vmatpush.msra.mxu0 0.0
        %245 = vmatpush.msra.mxu0 0.0
        %246 = vmatpush.msra.mxu0 0.0
        %247 = vmatpush.msra.mxu0 0.0
        %248 = vmatpush.msra.mxu0 0.0
        %249 = vmatpush.msra.mxu0 %v207
        %250 = vmatpush.msra.mxu0 %v204
        %251 = vmatmul.f32.gmra.mxu0 %v212
        %v252 = vpop.f32.mrf.mxu0
        %v253 = vadd.f32 0.0, %v252
        %254 = vmatmul.f32.gmra.mxu0 %v215
        %v255 = vpop.f32.mrf.mxu0
        %v256 = vadd.f32 0.0, %v255
        %257 = vmatmul.f32.gmra.mxu0 %v218
        %v258 = vpop.f32.mrf.mxu0
        %v259 = vadd.f32 0.0, %v258
        %260 = vmatmul.f32.gmra.mxu0 %v221
        %v261 = vpop.f32.mrf.mxu0
        %v262 = vadd.f32 0.0, %v261
        %263 = vmatmul.f32.gmra.mxu0 %v224
        %v264 = vpop.f32.mrf.mxu0
        %v265 = vadd.f32 0.0, %v264
        %266 = vmatmul.f32.gmra.mxu0 %v227
        %v267 = vpop.f32.mrf.mxu0
        %v268 = vadd.f32 0.0, %v267
        %269 = vmatmul.f32.gmra.mxu0 %v230
        %v270 = vpop.f32.mrf.mxu0
        %v271 = vadd.f32 0.0, %v270
        %272 = vmatmul.f32.gmra.mxu0 %v233
        %v273 = vpop.f32.mrf.mxu0
        %v274 = vadd.f32 0.0, %v273
        %275 = vdwg.mxu0
        %276 = vmatpush.msra.mxu0 0.0
        %277 = vmatpush.msra.mxu0 0.0
        %278 = vmatpush.msra.mxu0 0.0
        %279 = vmatpush.msra.mxu0 0.0
        %280 = vmatpush.msra.mxu0 0.0
        %281 = vmatpush.msra.mxu0 0.0
        %282 = vmatpush.msra.mxu0 0.0
        %283 = vmatpush.msra.mxu0 0.0
        %284 = vmatpush.msra.mxu0 0.0
        %285 = vmatpush.msra.mxu0 0.0
        %286 = vmatpush.msra.mxu0 0.0
        %287 = vmatpush.msra.mxu0 0.0
        %288 = vmatpush.msra.mxu0 0.0
        %289 = vmatpush.msra.mxu0 0.0
        %290 = vmatpush.msra.mxu0 %v208
        %291 = vmatpush.msra.mxu0 %v205
        %292 = vmatmul.f32.gmra.mxu0 %v212
        %v293 = vpop.f32.mrf.mxu0
        %v294 = vadd.f32 0.0, %v293
        %295 = vmatmul.f32.gmra.mxu0 %v215
        %v296 = vpop.f32.mrf.mxu0
        %v297 = vadd.f32 0.0, %v296
        %298 = vmatmul.f32.gmra.mxu0 %v218
        %v299 = vpop.f32.mrf.mxu0
        %v300 = vadd.f32 0.0, %v299
        %301 = vmatmul.f32.gmra.mxu0 %v221
        %v302 = vpop.f32.mrf.mxu0
        %v303 = vadd.f32 0.0, %v302
        %304 = vmatmul.f32.gmra.mxu0 %v224
        %v305 = vpop.f32.mrf.mxu0
        %v306 = vadd.f32 0.0, %v305
        %307 = vmatmul.f32.gmra.mxu0 %v227
        %v308 = vpop.f32.mrf.mxu0
        %v309 = vadd.f32 0.0, %v308
        %310 = vmatmul.f32.gmra.mxu0 %v230
        %v311 = vpop.f32.mrf.mxu0
        %v312 = vadd.f32 0.0, %v311
        %313 = vmatmul.f32.gmra.mxu0 %v233
        %v314 = vpop.f32.mrf.mxu0
        %v315 = vadd.f32 0.0, %v314
        %316 = vdwg.mxu0
        %317 = vmatpush.msra.mxu0 0.0
        %318 = vmatpush.msra.mxu0 0.0
        %319 = vmatpush.msra.mxu0 0.0
        %320 = vmatpush.msra.mxu0 0.0
        %321 = vmatpush.msra.mxu0 0.0
        %322 = vmatpush.msra.mxu0 0.0
        %323 = vmatpush.msra.mxu0 0.0
        %324 = vmatpush.msra.mxu0 0.0
        %325 = vmatpush.msra.mxu0 0.0
        %326 = vmatpush.msra.mxu0 0.0
        %327 = vmatpush.msra.mxu0 0.0
        %328 = vmatpush.msra.mxu0 0.0
        %329 = vmatpush.msra.mxu0 0.0
        %330 = vmatpush.msra.mxu0 0.0
        %331 = vmatpush.msra.mxu0 %v209
        %332 = vmatpush.msra.mxu0 %v206
        %333 = vmatmul.f32.gmra.mxu0 %v212
        %v334 = vpop.f32.mrf.mxu0
        %v335 = vadd.f32 0.0, %v334
        %336 = vmatmul.f32.gmra.mxu0 %v215
        %v337 = vpop.f32.mrf.mxu0
        %v338 = vadd.f32 0.0, %v337
        %339 = vmatmul.f32.gmra.mxu0 %v218
        %v340 = vpop.f32.mrf.mxu0
        %v341 = vadd.f32 0.0, %v340
        %342 = vmatmul.f32.gmra.mxu0 %v221
        %v343 = vpop.f32.mrf.mxu0
        %v344 = vadd.f32 0.0, %v343
        %345 = vmatmul.f32.gmra.mxu0 %v224
        %v346 = vpop.f32.mrf.mxu0
        %v347 = vadd.f32 0.0, %v346
        %348 = vmatmul.f32.gmra.mxu0 %v227
        %v349 = vpop.f32.mrf.mxu0
        %v350 = vadd.f32 0.0, %v349
        %351 = vmatmul.f32.gmra.mxu0 %v230
        %v352 = vpop.f32.mrf.mxu0
        %v353 = vadd.f32 0.0, %v352
        %354 = vmatmul.f32.gmra.mxu0 %v233
        %v355 = vpop.f32.mrf.mxu0
        %v356 = vadd.f32 0.0, %v355
        %357 = vdwg.mxu0
        %v358 = vld [vmem:[%s3] sm:$0xff]
        %v359 = vld [vmem:[%s3 + $0x8] sm:$0xff]
        %v360 = vld [vmem:[%s3 + $0x10] sm:$0xff]
        %v361 = vld [vmem:[%s3 + $0x18] sm:$0xff]
        %v362 = vld [vmem:[%s3 + $0x20] sm:$0xff]
        %v363 = vld [vmem:[%s3 + $0x28] sm:$0xff]
        %v364 = vld [vmem:[%s3 + $0x30] sm:$0xff]
        %v365 = vld [vmem:[%s3 + $0x38] sm:$0xff]
        %v366 = vld [vmem:[%s3 + $0x40] sm:$0xff]
        %v367 = vld [vmem:[%s3 + $0x48] sm:$0xff]
        %v368 = vld [vmem:[%s3 + $0x50] sm:$0xff]
        %v369 = vld [vmem:[%s3 + $0x58] sm:$0xff]
        %v370 = vld [vmem:[%s3 + $0x60] sm:$0xff]
        %v371 = vld [vmem:[%s3 + $0x68] sm:$0xff]
        %v372 = vld [vmem:[%s3 + $0x70] sm:$0xff]
        %v373 = vld [vmem:[%s3 + $0x78] sm:$0xff]
        %v374 = vld [vmem:[%s3 + $0x80] sm:$0xff]
        %v375 = vld [vmem:[%s3 + $0x88] sm:$0xff]
        %v376 = vld [vmem:[%s3 + $0x90] sm:$0xff]
        %v377 = vld [vmem:[%s3 + $0x98] sm:$0xff]
        %v378 = vld [vmem:[%s3 + $0xa0] sm:$0xff]
        %v379 = vld [vmem:[%s3 + $0xa8] sm:$0xff]
        %v380 = vld [vmem:[%s3 + $0xb0] sm:$0xff]
        %v381 = vld [vmem:[%s3 + $0xb8] sm:$0xff]
        %v382 = vld [vmem:[%s3 + $0xc0] sm:$0xff]
        %v383 = vld [vmem:[%s3 + $0xc8] sm:$0xff]
        %v384 = vld [vmem:[%s3 + $0xd0] sm:$0xff]
        %v385 = vld [vmem:[%s3 + $0xd8] sm:$0xff]
        %v386 = vld [vmem:[%s3 + $0xe0] sm:$0xff]
        %v387 = vld [vmem:[%s3 + $0xe8] sm:$0xff]
        %v388 = vld [vmem:[%s3 + $0xf0] sm:$0xff]
        %v389 = vld [vmem:[%s3 + $0xf8] sm:$0xff]
        %391 = vset.pattern.permute.xlu0 0
        %392 = vperm.xlu0 %391, %v358
        %v393 = vpop.permute.xlu0 %392
        %396 = vset.pattern.permute.xlu0 0
        %397 = vperm.xlu0 %396, %v359
        %v398 = vpop.permute.xlu0 %397
        %401 = vset.pattern.permute.xlu0 0
        %402 = vperm.xlu0 %401, %v360
        %v403 = vpop.permute.xlu0 %402
        %406 = vset.pattern.permute.xlu0 0
        %407 = vperm.xlu0 %406, %v361
        %v408 = vpop.permute.xlu0 %407
        %411 = vset.pattern.permute.xlu0 0
        %412 = vperm.xlu0 %411, %v362
        %v413 = vpop.permute.xlu0 %412
        %416 = vset.pattern.permute.xlu0 0
        %417 = vperm.xlu0 %416, %v363
        %v418 = vpop.permute.xlu0 %417
        %421 = vset.pattern.permute.xlu0 0
        %422 = vperm.xlu0 %421, %v364
        %v423 = vpop.permute.xlu0 %422
        %426 = vset.pattern.permute.xlu0 0
        %427 = vperm.xlu0 %426, %v365
        %v428 = vpop.permute.xlu0 %427
        %431 = vset.pattern.permute.xlu0 0
        %432 = vperm.xlu0 %431, %v366
        %v433 = vpop.permute.xlu0 %432
        %436 = vset.pattern.permute.xlu0 0
        %437 = vperm.xlu0 %436, %v367
        %v438 = vpop.permute.xlu0 %437
        %441 = vset.pattern.permute.xlu0 0
        %442 = vperm.xlu0 %441, %v368
        %v443 = vpop.permute.xlu0 %442
        %446 = vset.pattern.permute.xlu0 0
        %447 = vperm.xlu0 %446, %v369
        %v448 = vpop.permute.xlu0 %447
        %451 = vset.pattern.permute.xlu0 0
        %452 = vperm.xlu0 %451, %v370
        %v453 = vpop.permute.xlu0 %452
        %456 = vset.pattern.permute.xlu0 0
        %457 = vperm.xlu0 %456, %v371
        %v458 = vpop.permute.xlu0 %457
        %461 = vset.pattern.permute.xlu0 0
        %462 = vperm.xlu0 %461, %v372
        %v463 = vpop.permute.xlu0 %462
        %466 = vset.pattern.permute.xlu0 0
        %467 = vperm.xlu0 %466, %v373
        %v468 = vpop.permute.xlu0 %467
        %471 = vset.pattern.permute.xlu0 0
        %472 = vperm.xlu0 %471, %v374
        %v473 = vpop.permute.xlu0 %472
        %476 = vset.pattern.permute.xlu0 0
        %477 = vperm.xlu0 %476, %v375
        %v478 = vpop.permute.xlu0 %477
        %481 = vset.pattern.permute.xlu0 0
        %482 = vperm.xlu0 %481, %v376
        %v483 = vpop.permute.xlu0 %482
        %486 = vset.pattern.permute.xlu0 0
        %487 = vperm.xlu0 %486, %v377
        %v488 = vpop.permute.xlu0 %487
        %491 = vset.pattern.permute.xlu0 0
        %492 = vperm.xlu0 %491, %v378
        %v493 = vpop.permute.xlu0 %492
        %496 = vset.pattern.permute.xlu0 0
        %497 = vperm.xlu0 %496, %v379
        %v498 = vpop.permute.xlu0 %497
        %501 = vset.pattern.permute.xlu0 0
        %502 = vperm.xlu0 %501, %v380
        %v503 = vpop.permute.xlu0 %502
        %506 = vset.pattern.permute.xlu0 0
        %507 = vperm.xlu0 %506, %v381
        %v508 = vpop.permute.xlu0 %507
        %511 = vset.pattern.permute.xlu0 0
        %512 = vperm.xlu0 %511, %v382
        %v513 = vpop.permute.xlu0 %512
        %516 = vset.pattern.permute.xlu0 0
        %517 = vperm.xlu0 %516, %v383
        %v518 = vpop.permute.xlu0 %517
        %521 = vset.pattern.permute.xlu0 0
        %522 = vperm.xlu0 %521, %v384
        %v523 = vpop.permute.xlu0 %522
        %526 = vset.pattern.permute.xlu0 0
        %527 = vperm.xlu0 %526, %v385
        %v528 = vpop.permute.xlu0 %527
        %531 = vset.pattern.permute.xlu0 0
        %532 = vperm.xlu0 %531, %v386
        %v533 = vpop.permute.xlu0 %532
        %536 = vset.pattern.permute.xlu0 0
        %537 = vperm.xlu0 %536, %v387
        %v538 = vpop.permute.xlu0 %537
        %541 = vset.pattern.permute.xlu0 0
        %542 = vperm.xlu0 %541, %v388
        %v543 = vpop.permute.xlu0 %542
        %546 = vset.pattern.permute.xlu0 0
        %547 = vperm.xlu0 %546, %v389
        %v548 = vpop.permute.xlu0 %547
        %v550 = vld [vmem:[%s1] sm:$0xff]
        %v551 = vld [vmem:[%s1 + $0x8] sm:$0xff]
        %v552 = vld [vmem:[%s1 + $0x10] sm:$0xff]
        %v553 = vld [vmem:[%s1 + $0x18] sm:$0xff]
        %v554 = vld [vmem:[%s1 + $0x20] sm:$0xff]
        %v555 = vld [vmem:[%s1 + $0x28] sm:$0xff]
        %v556 = vld [vmem:[%s1 + $0x30] sm:$0xff]
        %v557 = vld [vmem:[%s1 + $0x38] sm:$0xff]
        %v558 = vld [vmem:[%s1 + $0x40] sm:$0xff]
        %v559 = vld [vmem:[%s1 + $0x48] sm:$0xff]
        %v560 = vld [vmem:[%s1 + $0x50] sm:$0xff]
        %v561 = vld [vmem:[%s1 + $0x58] sm:$0xff]
        %v562 = vld [vmem:[%s1 + $0x60] sm:$0xff]
        %v563 = vld [vmem:[%s1 + $0x68] sm:$0xff]
        %v564 = vld [vmem:[%s1 + $0x70] sm:$0xff]
        %v565 = vld [vmem:[%s1 + $0x78] sm:$0xff]
        %v566 = vld [vmem:[%s1 + $0x80] sm:$0xff]
        %v567 = vld [vmem:[%s1 + $0x88] sm:$0xff]
        %v568 = vld [vmem:[%s1 + $0x90] sm:$0xff]
        %v569 = vld [vmem:[%s1 + $0x98] sm:$0xff]
        %v570 = vld [vmem:[%s1 + $0xa0] sm:$0xff]
        %v571 = vld [vmem:[%s1 + $0xa8] sm:$0xff]
        %v572 = vld [vmem:[%s1 + $0xb0] sm:$0xff]
        %v573 = vld [vmem:[%s1 + $0xb8] sm:$0xff]
        %v574 = vld [vmem:[%s1 + $0xc0] sm:$0xff]
        %v575 = vld [vmem:[%s1 + $0xc8] sm:$0xff]
        %v576 = vld [vmem:[%s1 + $0xd0] sm:$0xff]
        %v577 = vld [vmem:[%s1 + $0xd8] sm:$0xff]
        %v578 = vld [vmem:[%s1 + $0xe0] sm:$0xff]
        %v579 = vld [vmem:[%s1 + $0xe8] sm:$0xff]
        %v580 = vld [vmem:[%s1 + $0xf0] sm:$0xff]
        %v581 = vld [vmem:[%s1 + $0xf8] sm:$0xff]
        %vm582 = vcmask 523264
        %v584 = vsel %vm582, %v550, 0
        %v587 = vsel %vm582, %v551, 0
        %v590 = vsel %vm582, %v552, 0
        %v593 = vsel %vm582, %v553, 0
        %v596 = vsel %vm582, %v554, 0
        %v599 = vsel %vm582, %v555, 0
        %v602 = vsel %vm582, %v556, 0
        %v605 = vsel %vm582, %v557, 0
        %v608 = vsel %vm582, %v558, 0
        %v611 = vsel %vm582, %v559, 0
        %v614 = vsel %vm582, %v560, 0
        %v617 = vsel %vm582, %v561, 0
        %v620 = vsel %vm582, %v562, 0
        %v623 = vsel %vm582, %v563, 0
        %v626 = vsel %vm582, %v564, 0
        %v629 = vsel %vm582, %v565, 0
        %v632 = vsel %vm582, %v566, 0
        %v635 = vsel %vm582, %v567, 0
        %v638 = vsel %vm582, %v568, 0
        %v641 = vsel %vm582, %v569, 0
        %v644 = vsel %vm582, %v570, 0
        %v647 = vsel %vm582, %v571, 0
        %v650 = vsel %vm582, %v572, 0
        %v653 = vsel %vm582, %v573, 0
        %v656 = vsel %vm582, %v574, 0
        %v659 = vsel %vm582, %v575, 0
        %v662 = vsel %vm582, %v576, 0
        %v665 = vsel %vm582, %v577, 0
        %v668 = vsel %vm582, %v578, 0
        %v671 = vsel %vm582, %v579, 0
        %v674 = vsel %vm582, %v580, 0
        %v677 = vsel %vm582, %v581, 0
        %679 = vmatpush.msra.mxu0 0.0
        %680 = vmatpush.msra.mxu0 0.0
        %681 = vmatpush.msra.mxu0 0.0
        %682 = vmatpush.msra.mxu0 0.0
        %683 = vmatpush.msra.mxu0 0.0
        %684 = vmatpush.msra.mxu0 0.0
        %685 = vmatpush.msra.mxu0 0.0
        %686 = vmatpush.msra.mxu0 0.0
        %687 = vmatpush.msra.mxu0 %v274
        %688 = vmatpush.msra.mxu0 %v271
        %689 = vmatpush.msra.mxu0 %v268
        %690 = vmatpush.msra.mxu0 %v265
        %691 = vmatpush.msra.mxu0 %v262
        %692 = vmatpush.msra.mxu0 %v259
        %693 = vmatpush.msra.mxu0 %v256
        %694 = vmatpush.msra.mxu0 %v253
        %695 = vmatmul.f32.gmra.mxu0 %v584
        %v696 = vpop.f32.mrf.mxu0
        %v697 = vadd.f32 0.0, %v696
        %698 = vmatmul.f32.gmra.mxu0 %v587
        %v699 = vpop.f32.mrf.mxu0
        %v700 = vadd.f32 0.0, %v699
        %701 = vmatmul.f32.gmra.mxu0 %v590
        %v702 = vpop.f32.mrf.mxu0
        %v703 = vadd.f32 0.0, %v702
        %704 = vmatmul.f32.gmra.mxu0 %v593
        %v705 = vpop.f32.mrf.mxu0
        %v706 = vadd.f32 0.0, %v705
        %707 = vmatmul.f32.gmra.mxu0 %v596
        %v708 = vpop.f32.mrf.mxu0
        %v709 = vadd.f32 0.0, %v708
        %710 = vmatmul.f32.gmra.mxu0 %v599
        %v711 = vpop.f32.mrf.mxu0
        %v712 = vadd.f32 0.0, %v711
        %713 = vmatmul.f32.gmra.mxu0 %v602
        %v714 = vpop.f32.mrf.mxu0
        %v715 = vadd.f32 0.0, %v714
        %716 = vmatmul.f32.gmra.mxu0 %v605
        %v717 = vpop.f32.mrf.mxu0
        %v718 = vadd.f32 0.0, %v717
        %719 = vmatmul.f32.gmra.mxu0 %v608
        %v720 = vpop.f32.mrf.mxu0
        %v721 = vadd.f32 0.0, %v720
        %722 = vmatmul.f32.gmra.mxu0 %v611
        %v723 = vpop.f32.mrf.mxu0
        %v724 = vadd.f32 0.0, %v723
        %725 = vmatmul.f32.gmra.mxu0 %v614
        %v726 = vpop.f32.mrf.mxu0
        %v727 = vadd.f32 0.0, %v726
        %728 = vmatmul.f32.gmra.mxu0 %v617
        %v729 = vpop.f32.mrf.mxu0
        %v730 = vadd.f32 0.0, %v729
        %731 = vmatmul.f32.gmra.mxu0 %v620
        %v732 = vpop.f32.mrf.mxu0
        %v733 = vadd.f32 0.0, %v732
        %734 = vmatmul.f32.gmra.mxu0 %v623
        %v735 = vpop.f32.mrf.mxu0
        %v736 = vadd.f32 0.0, %v735
        %737 = vmatmul.f32.gmra.mxu0 %v626
        %v738 = vpop.f32.mrf.mxu0
        %v739 = vadd.f32 0.0, %v738
        %740 = vmatmul.f32.gmra.mxu0 %v629
        %v741 = vpop.f32.mrf.mxu0
        %v742 = vadd.f32 0.0, %v741
        %743 = vmatmul.f32.gmra.mxu0 %v632
        %v744 = vpop.f32.mrf.mxu0
        %v745 = vadd.f32 0.0, %v744
        %746 = vmatmul.f32.gmra.mxu0 %v635
        %v747 = vpop.f32.mrf.mxu0
        %v748 = vadd.f32 0.0, %v747
        %749 = vmatmul.f32.gmra.mxu0 %v638
        %v750 = vpop.f32.mrf.mxu0
        %v751 = vadd.f32 0.0, %v750
        %752 = vmatmul.f32.gmra.mxu0 %v641
        %v753 = vpop.f32.mrf.mxu0
        %v754 = vadd.f32 0.0, %v753
        %755 = vmatmul.f32.gmra.mxu0 %v644
        %v756 = vpop.f32.mrf.mxu0
        %v757 = vadd.f32 0.0, %v756
        %758 = vmatmul.f32.gmra.mxu0 %v647
        %v759 = vpop.f32.mrf.mxu0
        %v760 = vadd.f32 0.0, %v759
        %761 = vmatmul.f32.gmra.mxu0 %v650
        %v762 = vpop.f32.mrf.mxu0
        %v763 = vadd.f32 0.0, %v762
        %764 = vmatmul.f32.gmra.mxu0 %v653
        %v765 = vpop.f32.mrf.mxu0
        %v766 = vadd.f32 0.0, %v765
        %767 = vmatmul.f32.gmra.mxu0 %v656
        %v768 = vpop.f32.mrf.mxu0
        %v769 = vadd.f32 0.0, %v768
        %770 = vmatmul.f32.gmra.mxu0 %v659
        %v771 = vpop.f32.mrf.mxu0
        %v772 = vadd.f32 0.0, %v771
        %773 = vmatmul.f32.gmra.mxu0 %v662
        %v774 = vpop.f32.mrf.mxu0
        %v775 = vadd.f32 0.0, %v774
        %776 = vmatmul.f32.gmra.mxu0 %v665
        %v777 = vpop.f32.mrf.mxu0
        %v778 = vadd.f32 0.0, %v777
        %779 = vmatmul.f32.gmra.mxu0 %v668
        %v780 = vpop.f32.mrf.mxu0
        %v781 = vadd.f32 0.0, %v780
        %782 = vmatmul.f32.gmra.mxu0 %v671
        %v783 = vpop.f32.mrf.mxu0
        %v784 = vadd.f32 0.0, %v783
        %785 = vmatmul.f32.gmra.mxu0 %v674
        %v786 = vpop.f32.mrf.mxu0
        %v787 = vadd.f32 0.0, %v786
        %788 = vmatmul.f32.gmra.mxu0 %v677
        %v789 = vpop.f32.mrf.mxu0
        %v790 = vadd.f32 0.0, %v789
        %791 = vdwg.mxu0
        %v792 = vadd.f32 %v393, %v697
        %v793 = vadd.f32 %v398, %v700
        %v794 = vadd.f32 %v403, %v703
        %v795 = vadd.f32 %v408, %v706
        %v796 = vadd.f32 %v413, %v709
        %v797 = vadd.f32 %v418, %v712
        %v798 = vadd.f32 %v423, %v715
        %v799 = vadd.f32 %v428, %v718
        %v800 = vadd.f32 %v433, %v721
        %v801 = vadd.f32 %v438, %v724
        %v802 = vadd.f32 %v443, %v727
        %v803 = vadd.f32 %v448, %v730
        %v804 = vadd.f32 %v453, %v733
        %v805 = vadd.f32 %v458, %v736
        %v806 = vadd.f32 %v463, %v739
        %v807 = vadd.f32 %v468, %v742
        %v808 = vadd.f32 %v473, %v745
        %v809 = vadd.f32 %v478, %v748
        %v810 = vadd.f32 %v483, %v751
        %v811 = vadd.f32 %v488, %v754
        %v812 = vadd.f32 %v493, %v757
        %v813 = vadd.f32 %v498, %v760
        %v814 = vadd.f32 %v503, %v763
        %v815 = vadd.f32 %v508, %v766
        %v816 = vadd.f32 %v513, %v769
        %v817 = vadd.f32 %v518, %v772
        %v818 = vadd.f32 %v523, %v775
        %v819 = vadd.f32 %v528, %v778
        %v820 = vadd.f32 %v533, %v781
        %v821 = vadd.f32 %v538, %v784
        %v822 = vadd.f32 %v543, %v787
        %v823 = vadd.f32 %v548, %v790
        %s824 = scalar_lea.vmem %s1, 256
        %v825 = vld [vmem:[%s824] sm:$0xff]
        %v826 = vld [vmem:[%s824 + $0x8] sm:$0xff]
        %v827 = vld [vmem:[%s824 + $0x10] sm:$0xff]
        %v828 = vld [vmem:[%s824 + $0x18] sm:$0xff]
        %v829 = vld [vmem:[%s824 + $0x20] sm:$0xff]
        %v830 = vld [vmem:[%s824 + $0x28] sm:$0xff]
        %v831 = vld [vmem:[%s824 + $0x30] sm:$0xff]
        %v832 = vld [vmem:[%s824 + $0x38] sm:$0xff]
        %v833 = vld [vmem:[%s824 + $0x40] sm:$0xff]
        %v834 = vld [vmem:[%s824 + $0x48] sm:$0xff]
        %v835 = vld [vmem:[%s824 + $0x50] sm:$0xff]
        %v836 = vld [vmem:[%s824 + $0x58] sm:$0xff]
        %v837 = vld [vmem:[%s824 + $0x60] sm:$0xff]
        %v838 = vld [vmem:[%s824 + $0x68] sm:$0xff]
        %v839 = vld [vmem:[%s824 + $0x70] sm:$0xff]
        %v840 = vld [vmem:[%s824 + $0x78] sm:$0xff]
        %v841 = vld [vmem:[%s824 + $0x80] sm:$0xff]
        %v842 = vld [vmem:[%s824 + $0x88] sm:$0xff]
        %v843 = vld [vmem:[%s824 + $0x90] sm:$0xff]
        %v844 = vld [vmem:[%s824 + $0x98] sm:$0xff]
        %v845 = vld [vmem:[%s824 + $0xa0] sm:$0xff]
        %v846 = vld [vmem:[%s824 + $0xa8] sm:$0xff]
        %v847 = vld [vmem:[%s824 + $0xb0] sm:$0xff]
        %v848 = vld [vmem:[%s824 + $0xb8] sm:$0xff]
        %v849 = vld [vmem:[%s824 + $0xc0] sm:$0xff]
        %v850 = vld [vmem:[%s824 + $0xc8] sm:$0xff]
        %v851 = vld [vmem:[%s824 + $0xd0] sm:$0xff]
        %v852 = vld [vmem:[%s824 + $0xd8] sm:$0xff]
        %v853 = vld [vmem:[%s824 + $0xe0] sm:$0xff]
        %v854 = vld [vmem:[%s824 + $0xe8] sm:$0xff]
        %v855 = vld [vmem:[%s824 + $0xf0] sm:$0xff]
        %v856 = vld [vmem:[%s824 + $0xf8] sm:$0xff]
        %v858 = vsel %vm582, %v825, 0
        %v861 = vsel %vm582, %v826, 0
        %v864 = vsel %vm582, %v827, 0
        %v867 = vsel %vm582, %v828, 0
        %v870 = vsel %vm582, %v829, 0
        %v873 = vsel %vm582, %v830, 0
        %v876 = vsel %vm582, %v831, 0
        %v879 = vsel %vm582, %v832, 0
        %v882 = vsel %vm582, %v833, 0
        %v885 = vsel %vm582, %v834, 0
        %v888 = vsel %vm582, %v835, 0
        %v891 = vsel %vm582, %v836, 0
        %v894 = vsel %vm582, %v837, 0
        %v897 = vsel %vm582, %v838, 0
        %v900 = vsel %vm582, %v839, 0
        %v903 = vsel %vm582, %v840, 0
        %v906 = vsel %vm582, %v841, 0
        %v909 = vsel %vm582, %v842, 0
        %v912 = vsel %vm582, %v843, 0
        %v915 = vsel %vm582, %v844, 0
        %v918 = vsel %vm582, %v845, 0
        %v921 = vsel %vm582, %v846, 0
        %v924 = vsel %vm582, %v847, 0
        %v927 = vsel %vm582, %v848, 0
        %v930 = vsel %vm582, %v849, 0
        %v933 = vsel %vm582, %v850, 0
        %v936 = vsel %vm582, %v851, 0
        %v939 = vsel %vm582, %v852, 0
        %v942 = vsel %vm582, %v853, 0
        %v945 = vsel %vm582, %v854, 0
        %v948 = vsel %vm582, %v855, 0
        %v951 = vsel %vm582, %v856, 0
        %953 = vmatpush.msra.mxu0 0.0
        %954 = vmatpush.msra.mxu0 0.0
        %955 = vmatpush.msra.mxu0 0.0
        %956 = vmatpush.msra.mxu0 0.0
        %957 = vmatpush.msra.mxu0 0.0
        %958 = vmatpush.msra.mxu0 0.0
        %959 = vmatpush.msra.mxu0 0.0
        %960 = vmatpush.msra.mxu0 0.0
        %961 = vmatpush.msra.mxu0 %v315
        %962 = vmatpush.msra.mxu0 %v312
        %963 = vmatpush.msra.mxu0 %v309
        %964 = vmatpush.msra.mxu0 %v306
        %965 = vmatpush.msra.mxu0 %v303
        %966 = vmatpush.msra.mxu0 %v300
        %967 = vmatpush.msra.mxu0 %v297
        %968 = vmatpush.msra.mxu0 %v294
        %969 = vmatmul.f32.gmra.mxu0 %v858
        %v970 = vpop.f32.mrf.mxu0
        %v971 = vadd.f32 0.0, %v970
        %972 = vmatmul.f32.gmra.mxu0 %v861
        %v973 = vpop.f32.mrf.mxu0
        %v974 = vadd.f32 0.0, %v973
        %975 = vmatmul.f32.gmra.mxu0 %v864
        %v976 = vpop.f32.mrf.mxu0
        %v977 = vadd.f32 0.0, %v976
        %978 = vmatmul.f32.gmra.mxu0 %v867
        %v979 = vpop.f32.mrf.mxu0
        %v980 = vadd.f32 0.0, %v979
        %981 = vmatmul.f32.gmra.mxu0 %v870
        %v982 = vpop.f32.mrf.mxu0
        %v983 = vadd.f32 0.0, %v982
        %984 = vmatmul.f32.gmra.mxu0 %v873
        %v985 = vpop.f32.mrf.mxu0
        %v986 = vadd.f32 0.0, %v985
        %987 = vmatmul.f32.gmra.mxu0 %v876
        %v988 = vpop.f32.mrf.mxu0
        %v989 = vadd.f32 0.0, %v988
        %990 = vmatmul.f32.gmra.mxu0 %v879
        %v991 = vpop.f32.mrf.mxu0
        %v992 = vadd.f32 0.0, %v991
        %993 = vmatmul.f32.gmra.mxu0 %v882
        %v994 = vpop.f32.mrf.mxu0
        %v995 = vadd.f32 0.0, %v994
        %996 = vmatmul.f32.gmra.mxu0 %v885
        %v997 = vpop.f32.mrf.mxu0
        %v998 = vadd.f32 0.0, %v997
        %999 = vmatmul.f32.gmra.mxu0 %v888
        %v1000 = vpop.f32.mrf.mxu0
        %v1001 = vadd.f32 0.0, %v1000
        %1002 = vmatmul.f32.gmra.mxu0 %v891
        %v1003 = vpop.f32.mrf.mxu0
        %v1004 = vadd.f32 0.0, %v1003
        %1005 = vmatmul.f32.gmra.mxu0 %v894
        %v1006 = vpop.f32.mrf.mxu0
        %v1007 = vadd.f32 0.0, %v1006
        %1008 = vmatmul.f32.gmra.mxu0 %v897
        %v1009 = vpop.f32.mrf.mxu0
        %v1010 = vadd.f32 0.0, %v1009
        %1011 = vmatmul.f32.gmra.mxu0 %v900
        %v1012 = vpop.f32.mrf.mxu0
        %v1013 = vadd.f32 0.0, %v1012
        %1014 = vmatmul.f32.gmra.mxu0 %v903
        %v1015 = vpop.f32.mrf.mxu0
        %v1016 = vadd.f32 0.0, %v1015
        %1017 = vmatmul.f32.gmra.mxu0 %v906
        %v1018 = vpop.f32.mrf.mxu0
        %v1019 = vadd.f32 0.0, %v1018
        %1020 = vmatmul.f32.gmra.mxu0 %v909
        %v1021 = vpop.f32.mrf.mxu0
        %v1022 = vadd.f32 0.0, %v1021
        %1023 = vmatmul.f32.gmra.mxu0 %v912
        %v1024 = vpop.f32.mrf.mxu0
        %v1025 = vadd.f32 0.0, %v1024
        %1026 = vmatmul.f32.gmra.mxu0 %v915
        %v1027 = vpop.f32.mrf.mxu0
        %v1028 = vadd.f32 0.0, %v1027
        %1029 = vmatmul.f32.gmra.mxu0 %v918
        %v1030 = vpop.f32.mrf.mxu0
        %v1031 = vadd.f32 0.0, %v1030
        %1032 = vmatmul.f32.gmra.mxu0 %v921
        %v1033 = vpop.f32.mrf.mxu0
        %v1034 = vadd.f32 0.0, %v1033
        %1035 = vmatmul.f32.gmra.mxu0 %v924
        %v1036 = vpop.f32.mrf.mxu0
        %v1037 = vadd.f32 0.0, %v1036
        %1038 = vmatmul.f32.gmra.mxu0 %v927
        %v1039 = vpop.f32.mrf.mxu0
        %v1040 = vadd.f32 0.0, %v1039
        %1041 = vmatmul.f32.gmra.mxu0 %v930
        %v1042 = vpop.f32.mrf.mxu0
        %v1043 = vadd.f32 0.0, %v1042
        %1044 = vmatmul.f32.gmra.mxu0 %v933
        %v1045 = vpop.f32.mrf.mxu0
        %v1046 = vadd.f32 0.0, %v1045
        %1047 = vmatmul.f32.gmra.mxu0 %v936
        %v1048 = vpop.f32.mrf.mxu0
        %v1049 = vadd.f32 0.0, %v1048
        %1050 = vmatmul.f32.gmra.mxu0 %v939
        %v1051 = vpop.f32.mrf.mxu0
        %v1052 = vadd.f32 0.0, %v1051
        %1053 = vmatmul.f32.gmra.mxu0 %v942
        %v1054 = vpop.f32.mrf.mxu0
        %v1055 = vadd.f32 0.0, %v1054
        %1056 = vmatmul.f32.gmra.mxu0 %v945
        %v1057 = vpop.f32.mrf.mxu0
        %v1058 = vadd.f32 0.0, %v1057
        %1059 = vmatmul.f32.gmra.mxu0 %v948
        %v1060 = vpop.f32.mrf.mxu0
        %v1061 = vadd.f32 0.0, %v1060
        %1062 = vmatmul.f32.gmra.mxu0 %v951
        %v1063 = vpop.f32.mrf.mxu0
        %v1064 = vadd.f32 0.0, %v1063
        %1065 = vdwg.mxu0
        %v1066 = vadd.f32 %v792, %v971
        %v1067 = vadd.f32 %v793, %v974
        %v1068 = vadd.f32 %v794, %v977
        %v1069 = vadd.f32 %v795, %v980
        %v1070 = vadd.f32 %v796, %v983
        %v1071 = vadd.f32 %v797, %v986
        %v1072 = vadd.f32 %v798, %v989
        %v1073 = vadd.f32 %v799, %v992
        %v1074 = vadd.f32 %v800, %v995
        %v1075 = vadd.f32 %v801, %v998
        %v1076 = vadd.f32 %v802, %v1001
        %v1077 = vadd.f32 %v803, %v1004
        %v1078 = vadd.f32 %v804, %v1007
        %v1079 = vadd.f32 %v805, %v1010
        %v1080 = vadd.f32 %v806, %v1013
        %v1081 = vadd.f32 %v807, %v1016
        %v1082 = vadd.f32 %v808, %v1019
        %v1083 = vadd.f32 %v809, %v1022
        %v1084 = vadd.f32 %v810, %v1025
        %v1085 = vadd.f32 %v811, %v1028
        %v1086 = vadd.f32 %v812, %v1031
        %v1087 = vadd.f32 %v813, %v1034
        %v1088 = vadd.f32 %v814, %v1037
        %v1089 = vadd.f32 %v815, %v1040
        %v1090 = vadd.f32 %v816, %v1043
        %v1091 = vadd.f32 %v817, %v1046
        %v1092 = vadd.f32 %v818, %v1049
        %v1093 = vadd.f32 %v819, %v1052
        %v1094 = vadd.f32 %v820, %v1055
        %v1095 = vadd.f32 %v821, %v1058
        %v1096 = vadd.f32 %v822, %v1061
        %v1097 = vadd.f32 %v823, %v1064
        %s1098 = scalar_lea.vmem %s1, 512
        %v1099 = vld [vmem:[%s1098] sm:$0xff]
        %v1100 = vld [vmem:[%s1098 + $0x8] sm:$0xff]
        %v1101 = vld [vmem:[%s1098 + $0x10] sm:$0xff]
        %v1102 = vld [vmem:[%s1098 + $0x18] sm:$0xff]
        %v1103 = vld [vmem:[%s1098 + $0x20] sm:$0xff]
        %v1104 = vld [vmem:[%s1098 + $0x28] sm:$0xff]
        %v1105 = vld [vmem:[%s1098 + $0x30] sm:$0xff]
        %v1106 = vld [vmem:[%s1098 + $0x38] sm:$0xff]
        %v1107 = vld [vmem:[%s1098 + $0x40] sm:$0xff]
        %v1108 = vld [vmem:[%s1098 + $0x48] sm:$0xff]
        %v1109 = vld [vmem:[%s1098 + $0x50] sm:$0xff]
        %v1110 = vld [vmem:[%s1098 + $0x58] sm:$0xff]
        %v1111 = vld [vmem:[%s1098 + $0x60] sm:$0xff]
        %v1112 = vld [vmem:[%s1098 + $0x68] sm:$0xff]
        %v1113 = vld [vmem:[%s1098 + $0x70] sm:$0xff]
        %v1114 = vld [vmem:[%s1098 + $0x78] sm:$0xff]
        %v1115 = vld [vmem:[%s1098 + $0x80] sm:$0xff]
        %v1116 = vld [vmem:[%s1098 + $0x88] sm:$0xff]
        %v1117 = vld [vmem:[%s1098 + $0x90] sm:$0xff]
        %v1118 = vld [vmem:[%s1098 + $0x98] sm:$0xff]
        %v1119 = vld [vmem:[%s1098 + $0xa0] sm:$0xff]
        %v1120 = vld [vmem:[%s1098 + $0xa8] sm:$0xff]
        %v1121 = vld [vmem:[%s1098 + $0xb0] sm:$0xff]
        %v1122 = vld [vmem:[%s1098 + $0xb8] sm:$0xff]
        %v1123 = vld [vmem:[%s1098 + $0xc0] sm:$0xff]
        %v1124 = vld [vmem:[%s1098 + $0xc8] sm:$0xff]
        %v1125 = vld [vmem:[%s1098 + $0xd0] sm:$0xff]
        %v1126 = vld [vmem:[%s1098 + $0xd8] sm:$0xff]
        %v1127 = vld [vmem:[%s1098 + $0xe0] sm:$0xff]
        %v1128 = vld [vmem:[%s1098 + $0xe8] sm:$0xff]
        %v1129 = vld [vmem:[%s1098 + $0xf0] sm:$0xff]
        %v1130 = vld [vmem:[%s1098 + $0xf8] sm:$0xff]
        %v1132 = vsel %vm582, %v1099, 0
        %v1135 = vsel %vm582, %v1100, 0
        %v1138 = vsel %vm582, %v1101, 0
        %v1141 = vsel %vm582, %v1102, 0
        %v1144 = vsel %vm582, %v1103, 0
        %v1147 = vsel %vm582, %v1104, 0
        %v1150 = vsel %vm582, %v1105, 0
        %v1153 = vsel %vm582, %v1106, 0
        %v1156 = vsel %vm582, %v1107, 0
        %v1159 = vsel %vm582, %v1108, 0
        %v1162 = vsel %vm582, %v1109, 0
        %v1165 = vsel %vm582, %v1110, 0
        %v1168 = vsel %vm582, %v1111, 0
        %v1171 = vsel %vm582, %v1112, 0
        %v1174 = vsel %vm582, %v1113, 0
        %v1177 = vsel %vm582, %v1114, 0
        %v1180 = vsel %vm582, %v1115, 0
        %v1183 = vsel %vm582, %v1116, 0
        %v1186 = vsel %vm582, %v1117, 0
        %v1189 = vsel %vm582, %v1118, 0
        %v1192 = vsel %vm582, %v1119, 0
        %v1195 = vsel %vm582, %v1120, 0
        %v1198 = vsel %vm582, %v1121, 0
        %v1201 = vsel %vm582, %v1122, 0
        %v1204 = vsel %vm582, %v1123, 0
        %v1207 = vsel %vm582, %v1124, 0
        %v1210 = vsel %vm582, %v1125, 0
        %v1213 = vsel %vm582, %v1126, 0
        %v1216 = vsel %vm582, %v1127, 0
        %v1219 = vsel %vm582, %v1128, 0
        %v1222 = vsel %vm582, %v1129, 0
        %v1225 = vsel %vm582, %v1130, 0
        %1227 = vmatpush.msra.mxu0 0.0
        %1228 = vmatpush.msra.mxu0 0.0
        %1229 = vmatpush.msra.mxu0 0.0
        %1230 = vmatpush.msra.mxu0 0.0
        %1231 = vmatpush.msra.mxu0 0.0
        %1232 = vmatpush.msra.mxu0 0.0
        %1233 = vmatpush.msra.mxu0 0.0
        %1234 = vmatpush.msra.mxu0 0.0
        %1235 = vmatpush.msra.mxu0 %v356
        %1236 = vmatpush.msra.mxu0 %v353
        %1237 = vmatpush.msra.mxu0 %v350
        %1238 = vmatpush.msra.mxu0 %v347
        %1239 = vmatpush.msra.mxu0 %v344
        %1240 = vmatpush.msra.mxu0 %v341
        %1241 = vmatpush.msra.mxu0 %v338
        %1242 = vmatpush.msra.mxu0 %v335
        %1243 = vmatmul.f32.gmra.mxu0 %v1132
        %v1244 = vpop.f32.mrf.mxu0
        %v1245 = vadd.f32 0.0, %v1244
        %1246 = vmatmul.f32.gmra.mxu0 %v1135
        %v1247 = vpop.f32.mrf.mxu0
        %v1248 = vadd.f32 0.0, %v1247
        %1249 = vmatmul.f32.gmra.mxu0 %v1138
        %v1250 = vpop.f32.mrf.mxu0
        %v1251 = vadd.f32 0.0, %v1250
        %1252 = vmatmul.f32.gmra.mxu0 %v1141
        %v1253 = vpop.f32.mrf.mxu0
        %v1254 = vadd.f32 0.0, %v1253
        %1255 = vmatmul.f32.gmra.mxu0 %v1144
        %v1256 = vpop.f32.mrf.mxu0
        %v1257 = vadd.f32 0.0, %v1256
        %1258 = vmatmul.f32.gmra.mxu0 %v1147
        %v1259 = vpop.f32.mrf.mxu0
        %v1260 = vadd.f32 0.0, %v1259
        %1261 = vmatmul.f32.gmra.mxu0 %v1150
        %v1262 = vpop.f32.mrf.mxu0
        %v1263 = vadd.f32 0.0, %v1262
        %1264 = vmatmul.f32.gmra.mxu0 %v1153
        %v1265 = vpop.f32.mrf.mxu0
        %v1266 = vadd.f32 0.0, %v1265
        %1267 = vmatmul.f32.gmra.mxu0 %v1156
        %v1268 = vpop.f32.mrf.mxu0
        %v1269 = vadd.f32 0.0, %v1268
        %1270 = vmatmul.f32.gmra.mxu0 %v1159
        %v1271 = vpop.f32.mrf.mxu0
        %v1272 = vadd.f32 0.0, %v1271
        %1273 = vmatmul.f32.gmra.mxu0 %v1162
        %v1274 = vpop.f32.mrf.mxu0
        %v1275 = vadd.f32 0.0, %v1274
        %1276 = vmatmul.f32.gmra.mxu0 %v1165
        %v1277 = vpop.f32.mrf.mxu0
        %v1278 = vadd.f32 0.0, %v1277
        %1279 = vmatmul.f32.gmra.mxu0 %v1168
        %v1280 = vpop.f32.mrf.mxu0
        %v1281 = vadd.f32 0.0, %v1280
        %1282 = vmatmul.f32.gmra.mxu0 %v1171
        %v1283 = vpop.f32.mrf.mxu0
        %v1284 = vadd.f32 0.0, %v1283
        %1285 = vmatmul.f32.gmra.mxu0 %v1174
        %v1286 = vpop.f32.mrf.mxu0
        %v1287 = vadd.f32 0.0, %v1286
        %1288 = vmatmul.f32.gmra.mxu0 %v1177
        %v1289 = vpop.f32.mrf.mxu0
        %v1290 = vadd.f32 0.0, %v1289
        %1291 = vmatmul.f32.gmra.mxu0 %v1180
        %v1292 = vpop.f32.mrf.mxu0
        %v1293 = vadd.f32 0.0, %v1292
        %1294 = vmatmul.f32.gmra.mxu0 %v1183
        %v1295 = vpop.f32.mrf.mxu0
        %v1296 = vadd.f32 0.0, %v1295
        %1297 = vmatmul.f32.gmra.mxu0 %v1186
        %v1298 = vpop.f32.mrf.mxu0
        %v1299 = vadd.f32 0.0, %v1298
        %1300 = vmatmul.f32.gmra.mxu0 %v1189
        %v1301 = vpop.f32.mrf.mxu0
        %v1302 = vadd.f32 0.0, %v1301
        %1303 = vmatmul.f32.gmra.mxu0 %v1192
        %v1304 = vpop.f32.mrf.mxu0
        %v1305 = vadd.f32 0.0, %v1304
        %1306 = vmatmul.f32.gmra.mxu0 %v1195
        %v1307 = vpop.f32.mrf.mxu0
        %v1308 = vadd.f32 0.0, %v1307
        %1309 = vmatmul.f32.gmra.mxu0 %v1198
        %v1310 = vpop.f32.mrf.mxu0
        %v1311 = vadd.f32 0.0, %v1310
        %1312 = vmatmul.f32.gmra.mxu0 %v1201
        %v1313 = vpop.f32.mrf.mxu0
        %v1314 = vadd.f32 0.0, %v1313
        %1315 = vmatmul.f32.gmra.mxu0 %v1204
        %v1316 = vpop.f32.mrf.mxu0
        %v1317 = vadd.f32 0.0, %v1316
        %1318 = vmatmul.f32.gmra.mxu0 %v1207
        %v1319 = vpop.f32.mrf.mxu0
        %v1320 = vadd.f32 0.0, %v1319
        %1321 = vmatmul.f32.gmra.mxu0 %v1210
        %v1322 = vpop.f32.mrf.mxu0
        %v1323 = vadd.f32 0.0, %v1322
        %1324 = vmatmul.f32.gmra.mxu0 %v1213
        %v1325 = vpop.f32.mrf.mxu0
        %v1326 = vadd.f32 0.0, %v1325
        %1327 = vmatmul.f32.gmra.mxu0 %v1216
        %v1328 = vpop.f32.mrf.mxu0
        %v1329 = vadd.f32 0.0, %v1328
        %1330 = vmatmul.f32.gmra.mxu0 %v1219
        %v1331 = vpop.f32.mrf.mxu0
        %v1332 = vadd.f32 0.0, %v1331
        %1333 = vmatmul.f32.gmra.mxu0 %v1222
        %v1334 = vpop.f32.mrf.mxu0
        %v1335 = vadd.f32 0.0, %v1334
        %1336 = vmatmul.f32.gmra.mxu0 %v1225
        %v1337 = vpop.f32.mrf.mxu0
        %v1338 = vadd.f32 0.0, %v1337
        %1339 = vdwg.mxu0
        %v1340 = vadd.f32 %v1066, %v1245
        %v1341 = vadd.f32 %v1067, %v1248
        %v1342 = vadd.f32 %v1068, %v1251
        %v1343 = vadd.f32 %v1069, %v1254
        %v1344 = vadd.f32 %v1070, %v1257
        %v1345 = vadd.f32 %v1071, %v1260
        %v1346 = vadd.f32 %v1072, %v1263
        %v1347 = vadd.f32 %v1073, %v1266
        %v1348 = vadd.f32 %v1074, %v1269
        %v1349 = vadd.f32 %v1075, %v1272
        %v1350 = vadd.f32 %v1076, %v1275
        %v1351 = vadd.f32 %v1077, %v1278
        %v1352 = vadd.f32 %v1078, %v1281
        %v1353 = vadd.f32 %v1079, %v1284
        %v1354 = vadd.f32 %v1080, %v1287
        %v1355 = vadd.f32 %v1081, %v1290
        %v1356 = vadd.f32 %v1082, %v1293
        %v1357 = vadd.f32 %v1083, %v1296
        %v1358 = vadd.f32 %v1084, %v1299
        %v1359 = vadd.f32 %v1085, %v1302
        %v1360 = vadd.f32 %v1086, %v1305
        %v1361 = vadd.f32 %v1087, %v1308
        %v1362 = vadd.f32 %v1088, %v1311
        %v1363 = vadd.f32 %v1089, %v1314
        %v1364 = vadd.f32 %v1090, %v1317
        %v1365 = vadd.f32 %v1091, %v1320
        %v1366 = vadd.f32 %v1092, %v1323
        %v1367 = vadd.f32 %v1093, %v1326
        %v1368 = vadd.f32 %v1094, %v1329
        %v1369 = vadd.f32 %v1095, %v1332
        %v1370 = vadd.f32 %v1096, %v1335
        %v1371 = vadd.f32 %v1097, %v1338
        %1372 = vst [vmem:[%s190] sm:$0xff] %v1340
        %1373 = vst [vmem:[%s190 + $0x8] sm:$0xff] %v1341
        %1374 = vst [vmem:[%s190 + $0x10] sm:$0xff] %v1342
        %1375 = vst [vmem:[%s190 + $0x18] sm:$0xff] %v1343
        %1376 = vst [vmem:[%s190 + $0x20] sm:$0xff] %v1344
        %1377 = vst [vmem:[%s190 + $0x28] sm:$0xff] %v1345
        %1378 = vst [vmem:[%s190 + $0x30] sm:$0xff] %v1346
        %1379 = vst [vmem:[%s190 + $0x38] sm:$0xff] %v1347
        %1380 = vst [vmem:[%s190 + $0x40] sm:$0xff] %v1348
        %1381 = vst [vmem:[%s190 + $0x48] sm:$0xff] %v1349
        %1382 = vst [vmem:[%s190 + $0x50] sm:$0xff] %v1350
        %1383 = vst [vmem:[%s190 + $0x58] sm:$0xff] %v1351
        %1384 = vst [vmem:[%s190 + $0x60] sm:$0xff] %v1352
        %1385 = vst [vmem:[%s190 + $0x68] sm:$0xff] %v1353
        %1386 = vst [vmem:[%s190 + $0x70] sm:$0xff] %v1354
        %1387 = vst [vmem:[%s190 + $0x78] sm:$0xff] %v1355
        %1388 = vst [vmem:[%s190 + $0x80] sm:$0xff] %v1356
        %1389 = vst [vmem:[%s190 + $0x88] sm:$0xff] %v1357
        %1390 = vst [vmem:[%s190 + $0x90] sm:$0xff] %v1358
        %1391 = vst [vmem:[%s190 + $0x98] sm:$0xff] %v1359
        %1392 = vst [vmem:[%s190 + $0xa0] sm:$0xff] %v1360
        %1393 = vst [vmem:[%s190 + $0xa8] sm:$0xff] %v1361
        %1394 = vst [vmem:[%s190 + $0xb0] sm:$0xff] %v1362
        %1395 = vst [vmem:[%s190 + $0xb8] sm:$0xff] %v1363
        %1396 = vst [vmem:[%s190 + $0xc0] sm:$0xff] %v1364
        %1397 = vst [vmem:[%s190 + $0xc8] sm:$0xff] %v1365
        %1398 = vst [vmem:[%s190 + $0xd0] sm:$0xff] %v1366
        %1399 = vst [vmem:[%s190 + $0xd8] sm:$0xff] %v1367
        %1400 = vst [vmem:[%s190 + $0xe0] sm:$0xff] %v1368
        %1401 = vst [vmem:[%s190 + $0xe8] sm:$0xff] %v1369
        %1402 = vst [vmem:[%s190 + $0xf0] sm:$0xff] %v1370
        %1403 = vst [vmem:[%s190 + $0xf8] sm:$0xff] %v1371
        %s1404 = sand.u32 %s115, 1
        %s1405 = scalar_lea.sflag [#allocation3], %s1404
        %s1406 = sand.u32 %s115, 1
        %s1407 = smul.addr %s1406, 256
        %s1408 = scalar_lea.vmem [#allocation2], %s1407
        // Predicated region
        $region37: #{tpu_custom_call.1} parent=35 // pred_check
          %p1409 = pneg %p125
        $region38: #{tpu_custom_call.1} parent=35 // pred_check_branch
          %1411 = sbr.rel (%p1409) target = $region40
        $region39: #{tpu_custom_call.1} parent=35 // pred_region
          %1413 = vsyncadd %s1405, 0
          %s1414 = smul.addr %s18, 32
          %s1415 = smul.addr %s1414, 8
          %s1416 = scalar_lea.hbm %s4, %s1415
          %s1417 = sshll.u32 %s1408, 4
          %s1418 = int_to_ptr.vmem [resolvable:$true] %s1417
          %s1419 = sshll.u32 %s1416, 4
          %s1420 = int_to_ptr.hbm [resolvable:$true] %s1419
          %1425 = dma.vmem_to_hbm [thread:$0]  %s1418, 4096, %s1420, %s1405, 128, 128, 8
        $region40: #{tpu_custom_call.1} parent=35 // pred_fallthru
          _
      $region36: #{tpu_custom_call.1} parent=5 // pred_fallthru
        _
      %p1426 = scmp.le.s32.totalorder 2, %s13
      // Predicated region
      $region41: #{tpu_custom_call.1} parent=5 // pred_check
        %p1427 = pneg %p1426
      $region42: #{tpu_custom_call.1} parent=5 // pred_check_branch
        %1429 = sbr.rel (%p1427) target = $region44
      $region43: #{tpu_custom_call.1} parent=5 // pred_region
        %s1430 = ssub.s32 %s13, 2
        // Predicated region
        $region45: #{tpu_custom_call.1} parent=43 // pred_check
          %p1431 = pneg %p131
        $region46: #{tpu_custom_call.1} parent=43 // pred_check_branch
          %1433 = sbr.rel (%p1431) target = $region48
        $region47: #{tpu_custom_call.1} parent=43 // pred_region
          %s1434 = sand.u32 %s116, 1
          %s1435 = scalar_lea.sflag [#allocation3], %s1434
          %s1436 = sand.u32 %s116, 1
          %s1437 = smul.addr %s1436, 256
          %s1438 = scalar_lea.vmem [#allocation2], %s1437
          %1440 = dma.done %s1435, 4096
        $region48: #{tpu_custom_call.1} parent=43 // pred_fallthru
          _
      $region44: #{tpu_custom_call.1} parent=5 // pred_fallthru
        _
    $region6: #{tpu_custom_call.1} parent=1 // loop_footer
      %s17 = sadd.s32 1, %s13
    $region7: #{tpu_custom_call.1} parent=1 // loop_footer_branch
      %12 = sbr.rel target = $region3
    $region8: #{tpu_custom_call.1} parent=1 // loop_exit
      _
    %1441 = vsyncpa [#allocation3], 1
    %s1442 = scalar_lea.sflag [#allocation3], 1
    %1443 = vsyncpa %s1442, 1

</llo_original>
